<compile_context>
chip_gen: v5e
topology: v5e:2x2
jax: 0.10.0
libtpu: 0.0.40
codegen_flags: <defaults>
</compile_context>

<pallas_src>
import functools

import jax
import jax.numpy as jnp
from jax.experimental import pallas as pl
from jax.experimental.pallas import tpu as pltpu

COUNT_CLASS = 10

_LANE = 128
_SUBLANE = 8


def _round_up(v, m):
    return (v + m - 1) // m * m


# ----------------------------- Pallas kernel ------------------------------ #
def _make_fused_mlp_kernel(n_layers):
    """Fused MLP on one batch tile: out = W_L(... tanh(W_1 @ x + b_1) ...) + b_L.

    Kernel args:
      x_ref : (TB, D0p) padded input tile (one-hot labels already folded in)
      then per layer: w_ref (Din_p, Dout_p), b_ref (1, Dout_p)  (all zero-padded,
      constant index_maps -> VMEM-resident across batch-grid steps)
      o_ref : (TB, DL_p) padded output tile
    """

    def kernel(x_ref, *refs):
        w_refs = refs[0:2 * n_layers:2]
        b_refs = refs[1:2 * n_layers:2]
        o_ref = refs[2 * n_layers]

        h = x_ref[...].astype(jnp.float32)
        for li in range(n_layers):
            # Cast activations to the weight dtype at the dot input only (f32 by default,
            # bf16 when params were prepared in bf16); accumulate in f32 on the MXU.
            h = jnp.dot(h.astype(w_refs[li].dtype), w_refs[li][...],
                        preferred_element_type=jnp.float32)
            h = h + b_refs[li][...].astype(jnp.float32)   # f32 epilogue (v5e-safe)
            if li != n_layers - 1:
                h = jnp.tanh(h)                           # EUP
        o_ref[...] = h.astype(o_ref.dtype)

    return kernel


# --------------------------- Module equivalent ----------------------------- #
def init_fully_connected(key, sizes):
    """PyTorch nn.Linear default init: U(-1/sqrt(fan_in), 1/sqrt(fan_in))."""
    params = []
    for i in range(len(sizes) - 1):
        fan_in, fan_out = sizes[i], sizes[i + 1]
        key, kw, kb = jax.random.split(key, 3)
        bound = 1.0 / jnp.sqrt(jnp.float32(fan_in))
        # stored as (in, out): equivalent to PyTorch weight (out, in) transposed
        w = jax.random.uniform(kw, (fan_in, fan_out), jnp.float32, -bound, bound)
        b = jax.random.uniform(kb, (fan_out,), jnp.float32, -bound, bound)
        params.append((w, b))
    return params


def prepare_params(params, matmul_dtype=jnp.float32):
    """One-time prep: zero-pad weights/biases to lane-aligned shapes (outside the jit).

    Use matmul_dtype=jnp.bfloat16 for realistic batches on v6e/v7x (halves weight DMA,
    native MXU rate); biases stay f32 so the epilogue stays f32 on all generations.
    """
    padded = []
    for w, b in params:
        din_p = _round_up(w.shape[0], _LANE)
        dout_p = _round_up(w.shape[1], _LANE)
        w_pad = (jnp.zeros((din_p, dout_p), matmul_dtype)
                 .at[:w.shape[0], :w.shape[1]].set(w.astype(matmul_dtype)))
        b_pad = (jnp.zeros((1, dout_p), jnp.float32)
                 .at[:, :b.shape[-1]].set(jnp.reshape(b, (1, -1)).astype(jnp.float32)))
        padded.append((w_pad, b_pad))
    return padded


@functools.partial(jax.jit, static_argnames=("sizes", "flatten"))
def fully_connected_forward(padded_params, x, y, *, sizes, flatten=True):
    """padded_params: output of prepare_params; x: image batch; y: int class labels."""
    if flatten:
        x = x.reshape(x.shape[0], -1)
    B, F = x.shape
    n_layers = len(padded_params)
    assert sizes[0] == F + COUNT_CLASS, "first layer expects [x, onehot(y)]"
    d_out = sizes[-1]

    # Batch tiling: up to 512 rows per tile (>= ~85% of HBM roofline for big batches),
    # leading grid axis marked "parallel" (shards across v7x's two TensorCores).
    TB = min(512, _round_up(B, _SUBLANE))
    Bp = _round_up(B, TB)

    d0p = padded_params[0][0].shape[0]
    out_p = padded_params[-1][0].shape[1]

    # Fold the one-hot(label) concat into the (already necessary) zero-pad of x.
    # Only real rows [0, B) get a one-hot; padding rows stay exactly zero.
    x_pad = jnp.zeros((Bp, d0p), jnp.float32).at[:B, :F].set(x.astype(jnp.float32))
    x_pad = x_pad.at[jnp.arange(B), F + y.astype(jnp.int32)].set(1.0)

    args = [x_pad]
    in_specs = [pl.BlockSpec((TB, d0p), lambda b: (b, 0))]
    for (w_pad, b_pad) in padded_params:
        din_p, dout_p = w_pad.shape
        args += [w_pad, b_pad]
        in_specs += [
            pl.BlockSpec((din_p, dout_p), lambda b: (0, 0)),  # weights VMEM-resident
            pl.BlockSpec((1, dout_p), lambda b: (0, 0)),
        ]

    # Advisory cost estimate with *unpadded* (real) math.
    flops = 0
    transcendentals = 0
    for li in range(n_layers):
        din, dout = sizes[li], sizes[li + 1]
        flops += 2 * B * din * dout + B * dout
        if li != n_layers - 1:
            transcendentals += B * dout
    bytes_accessed = (x_pad.size * 4 + Bp * out_p * 4
                      + sum(w.size * w.dtype.itemsize + b.size * 4
                            for (w, b) in padded_params))

    kernel = _make_fused_mlp_kernel(n_layers)
    out_pad = pl.pallas_call(
        kernel,
        out_shape=jax.ShapeDtypeStruct((Bp, out_p), jnp.float32),
        grid=(Bp // TB,),
        in_specs=in_specs,
        out_specs=pl.BlockSpec((TB, out_p), lambda b: (b, 0)),
        compiler_params=pltpu.CompilerParams(dimension_semantics=("parallel",)),
        cost_estimate=pl.CostEstimate(
            flops=flops, transcendentals=transcendentals, bytes_accessed=bytes_accessed),
    )(*args)
    return out_pad[:B, :d_out]


# --------------------------------- main ------------------------------------ #
if __name__ == "__main__":
    key = jax.random.PRNGKey(0)
    k_x, k_y, k_p = jax.random.split(key, 3)

    # x: (B=2, C=4, H=4, W=4) -> flattened feature dim 64; +10 one-hot -> 74
    x = jax.random.normal(k_x, (2, 4, 4, 4), dtype=jnp.float32)
    y = jax.random.randint(k_y, (2,), 0, COUNT_CLASS)

    sizes = (4 * 4 * 4 + COUNT_CLASS, 32, 10)  # (74, 32, 10)
    params = init_fully_connected(k_p, sizes)
    padded_params = prepare_params(params)     # one-time, outside the jitted forward

    out = fully_connected_forward(padded_params, x, y, sizes=sizes, flatten=True)
    out = jax.block_until_ready(out)

    # Pure-JAX reference check (same math, no Pallas)
    xf = x.reshape(x.shape[0], -1)
    h_ref = jnp.concatenate(
        [xf, jax.nn.one_hot(y, COUNT_CLASS, dtype=jnp.float32)], axis=1)
    for li, (w, b) in enumerate(params):
        h_ref = h_ref @ w + b
        if li != len(params) - 1:
            h_ref = jnp.tanh(h_ref)
    assert out.shape == (2, 10)
    assert jnp.allclose(out, h_ref, atol=1e-5, rtol=1e-5)

    print("KERNEL_OK")
</pallas_src>

<mosaic_0001>
module attributes {stable_mosaic.version = 11 : i64} {
  func.func @kernel(%arg0: i32, %arg1: memref<8x128xf32, #tpu.memory_space<vmem>>, %arg2: memref<128x128xf32, #tpu.memory_space<vmem>>, %arg3: memref<1x128xf32, #tpu.memory_space<vmem>>, %arg4: memref<128x128xf32, #tpu.memory_space<vmem>>, %arg5: memref<1x128xf32, #tpu.memory_space<vmem>>, %arg6: memref<8x128xf32, #tpu.memory_space<vmem>>) attributes {dimension_semantics = [#tpu.dimension_semantics<parallel>], iteration_bounds = array<i64: 1>, scalar_prefetch = 0 : i64, scratch_operands = 0 : i64, tpu.core_type = #tpu.core_type<tc>, window_params = [{transform_indices = @transform_0, window_bounds = array<i64: 8, 128>}, {pipeline_mode = #tpu.pipeline_mode<synchronous>, transform_indices = @transform_1, window_bounds = array<i64: 128, 128>}, {pipeline_mode = #tpu.pipeline_mode<synchronous>, transform_indices = @transform_2, window_bounds = array<i64: 1, 128>}, {pipeline_mode = #tpu.pipeline_mode<synchronous>, transform_indices = @transform_3, window_bounds = array<i64: 128, 128>}, {pipeline_mode = #tpu.pipeline_mode<synchronous>, transform_indices = @transform_4, window_bounds = array<i64: 1, 128>}, {transform_indices = @transform_5, window_bounds = array<i64: 8, 128>}]} {
    %c0 = arith.constant 0 : index
    %c0_0 = arith.constant 0 : index
    %0 = vector.load %arg1[%c0, %c0_0] : memref<8x128xf32, #tpu.memory_space<vmem>>, vector<8x128xf32>
    %c0_1 = arith.constant 0 : index
    %c0_2 = arith.constant 0 : index
    %1 = vector.load %arg2[%c0_1, %c0_2] : memref<128x128xf32, #tpu.memory_space<vmem>>, vector<128x128xf32>
    %cst = arith.constant dense<0.000000e+00> : vector<8x128xf32>
    %2 = tpu.matmul %0, %1, %cst {dimension_numbers = #tpu.dot_dimension_numbers<[1], [0], [0], [1], [0, 0, 1, 1], [], []>} : vector<8x128xf32>, vector<128x128xf32>, vector<8x128xf32> -> vector<8x128xf32>
    %c0_3 = arith.constant 0 : index
    %c0_4 = arith.constant 0 : index
    %3 = vector.load %arg3[%c0_3, %c0_4] : memref<1x128xf32, #tpu.memory_space<vmem>>, vector<1x128xf32>
    %4 = vector.broadcast %3 : vector<1x128xf32> to vector<8x128xf32>
    %5 = arith.addf %2, %4 : vector<8x128xf32>
    %6 = math.tanh %5 : vector<8x128xf32>
    %c0_5 = arith.constant 0 : index
    %c0_6 = arith.constant 0 : index
    %7 = vector.load %arg4[%c0_5, %c0_6] : memref<128x128xf32, #tpu.memory_space<vmem>>, vector<128x128xf32>
    %cst_7 = arith.constant dense<0.000000e+00> : vector<8x128xf32>
    %8 = tpu.matmul %6, %7, %cst_7 {dimension_numbers = #tpu.dot_dimension_numbers<[1], [0], [0], [1], [0, 0, 1, 1], [], []>} : vector<8x128xf32>, vector<128x128xf32>, vector<8x128xf32> -> vector<8x128xf32>
    %c0_8 = arith.constant 0 : index
    %c0_9 = arith.constant 0 : index
    %9 = vector.load %arg5[%c0_8, %c0_9] : memref<1x128xf32, #tpu.memory_space<vmem>>, vector<1x128xf32>
    %10 = vector.broadcast %9 : vector<1x128xf32> to vector<8x128xf32>
    %11 = arith.addf %8, %10 : vector<8x128xf32>
    %c0_10 = arith.constant 0 : index
    %c0_11 = arith.constant 0 : index
    %12 = vector.load %arg6[%c0_10, %c0_11] : memref<8x128xf32, #tpu.memory_space<vmem>>, vector<8x128xf32>
    tpu.vector_store %arg6[%c0_10, %c0_11], %11 {strides = array<i32>} : memref<8x128xf32, #tpu.memory_space<vmem>>, vector<8x128xf32>,
    return
  }
  func.func @transform_0(%arg0: i32) -> (i32, i32) {
    %c0_i32 = arith.constant 0 : i32
    %c0_i32_0 = arith.constant 0 : i32
    return %arg0, %c0_i32 : i32, i32
  }
  func.func @transform_1(%arg0: i32) -> (i32, i32) {
    %c0_i32 = arith.constant 0 : i32
    %c0_i32_0 = arith.constant 0 : i32
    %c0_i32_1 = arith.constant 0 : i32
    return %c0_i32, %c0_i32_0 : i32, i32
  }
  func.func @transform_2(%arg0: i32) -> (i32, i32) {
    %c0_i32 = arith.constant 0 : i32
    %c0_i32_0 = arith.constant 0 : i32
    %c0_i32_1 = arith.constant 0 : i32
    return %c0_i32, %c0_i32_0 : i32, i32
  }
  func.func @transform_3(%arg0: i32) -> (i32, i32) {
    %c0_i32 = arith.constant 0 : i32
    %c0_i32_0 = arith.constant 0 : i32
    %c0_i32_1 = arith.constant 0 : i32
    return %c0_i32, %c0_i32_0 : i32, i32
  }
  func.func @transform_4(%arg0: i32) -> (i32, i32) {
    %c0_i32 = arith.constant 0 : i32
    %c0_i32_0 = arith.constant 0 : i32
    %c0_i32_1 = arith.constant 0 : i32
    return %c0_i32, %c0_i32_0 : i32, i32
  }
  func.func @transform_5(%arg0: i32) -> (i32, i32) {
    %c0_i32 = arith.constant 0 : i32
    %c0_i32_0 = arith.constant 0 : i32
    return %arg0, %c0_i32 : i32, i32
  }
}

</mosaic_0001>

<llo_original>
// kernel: fully_connected_forward.1
$region0: #{fully_connected_forward.1}
  #allocation0 [shape = 'u32[]', space=smem, size = 0x4, offset = 0x4, fixed_abs, tag = 'smem constant byte address 0x4 - core index']
  #allocation1 [shape = 'u32[72,128]{1,0:T(1,128)}', space=vmem, size = 0x9000, scoped, tag = 'internal scratch']
  %s0 = inlined_call_operand.vmem [shape: f32[8,128], index: 0, kind: input, shape index: {}]
  %s1 = inlined_call_operand.vmem [shape: f32[128,128], index: 1, kind: input, shape index: {}]
  %s2 = inlined_call_operand.vmem [shape: f32[1,128], index: 2, kind: input, shape index: {}]
  %s3 = inlined_call_operand.vmem [shape: f32[128,128], index: 3, kind: input, shape index: {}]
  %s4 = inlined_call_operand.vmem [shape: f32[1,128], index: 4, kind: input, shape index: {}]
  %s5 = inlined_call_operand.vmem [shape: f32[8,128], index: 5, kind: output, shape index: {}]
  %s6 = sld [smem:[#allocation0]]
  $region30: #{fully_connected_forward.1} parent=0
    _
  %s8 = ssub.s32 1, %s6
  %s9 = scalar_select 0, %s8, %s6
  // Predicated region
  $region2: #{fully_connected_forward.1} parent=0 // pred_check
    _
  $region3: #{fully_connected_forward.1} parent=0 // pred_check_branch
    %11 = sbr.rel (0) target = $region5
  $region4: #{fully_connected_forward.1} parent=0 // pred_region
    _
  $region5: #{fully_connected_forward.1} parent=0 // pred_fallthru
    _
  // Predicated region
  $region6: #{fully_connected_forward.1} parent=0 // pred_check
    _
  $region7: #{fully_connected_forward.1} parent=0 // pred_check_branch
    %13 = sbr.rel (0) target = $region9
  $region8: #{fully_connected_forward.1} parent=0 // pred_region
    _
  $region9: #{fully_connected_forward.1} parent=0 // pred_fallthru
    _
  // Predicated region
  $region10: #{fully_connected_forward.1} parent=0 // pred_check
    _
  $region11: #{fully_connected_forward.1} parent=0 // pred_check_branch
    %15 = sbr.rel (0) target = $region13
  $region12: #{fully_connected_forward.1} parent=0 // pred_region
    _
  $region13: #{fully_connected_forward.1} parent=0 // pred_fallthru
    _
  // Predicated region
  $region14: #{fully_connected_forward.1} parent=0 // pred_check
    _
  $region15: #{fully_connected_forward.1} parent=0 // pred_check_branch
    %17 = sbr.rel (0) target = $region17
  $region16: #{fully_connected_forward.1} parent=0 // pred_region
    _
  $region17: #{fully_connected_forward.1} parent=0 // pred_fallthru
    _
  // Predicated region
  $region18: #{fully_connected_forward.1} parent=0 // pred_check
    _
  $region19: #{fully_connected_forward.1} parent=0 // pred_check_branch
    %19 = sbr.rel (0) target = $region21
  $region20: #{fully_connected_forward.1} parent=0 // pred_region
    _
  $region21: #{fully_connected_forward.1} parent=0 // pred_fallthru
    _
  %v20 = vld [vmem:[%s0] sm:$0xff]
  %v21 = vld [vmem:[%s1] sm:$0xff]
  %v22 = vld [vmem:[%s1 + $0x8] sm:$0xff]
  %v23 = vld [vmem:[%s1 + $0x10] sm:$0xff]
  %v24 = vld [vmem:[%s1 + $0x18] sm:$0xff]
  %v25 = vld [vmem:[%s1 + $0x20] sm:$0xff]
  %v26 = vld [vmem:[%s1 + $0x28] sm:$0xff]
  %v27 = vld [vmem:[%s1 + $0x30] sm:$0xff]
  %v28 = vld [vmem:[%s1 + $0x38] sm:$0xff]
  %v29 = vld [vmem:[%s1 + $0x40] sm:$0xff]
  %v30 = vld [vmem:[%s1 + $0x48] sm:$0xff]
  %v31 = vld [vmem:[%s1 + $0x50] sm:$0xff]
  %v32 = vld [vmem:[%s1 + $0x58] sm:$0xff]
  %v33 = vld [vmem:[%s1 + $0x60] sm:$0xff]
  %v34 = vld [vmem:[%s1 + $0x68] sm:$0xff]
  %v35 = vld [vmem:[%s1 + $0x70] sm:$0xff]
  %v36 = vld [vmem:[%s1 + $0x78] sm:$0xff]
  %v37 = vld [vmem:[%s2] sm:$0x1]
  %v39 = vperm.slane %v37, 0
  %41 = vmatpush.msra.mxu0 %v36
  %42 = vmatpush.msra.mxu0 %v35
  %43 = vmatpush.msra.mxu0 %v34
  %44 = vmatpush.msra.mxu0 %v33
  %45 = vmatpush.msra.mxu0 %v32
  %46 = vmatpush.msra.mxu0 %v31
  %47 = vmatpush.msra.mxu0 %v30
  %48 = vmatpush.msra.mxu0 %v29
  %49 = vmatpush.msra.mxu0 %v28
  %50 = vmatpush.msra.mxu0 %v27
  %51 = vmatpush.msra.mxu0 %v26
  %52 = vmatpush.msra.mxu0 %v25
  %53 = vmatpush.msra.mxu0 %v24
  %54 = vmatpush.msra.mxu0 %v23
  %55 = vmatpush.msra.mxu0 %v22
  %56 = vmatpush.msra.mxu0 %v21
  %57 = vmatmul.f32.gmra.mxu0 %v20
  %v58 = vpop.f32.mrf.mxu0
  %v59 = vadd.f32 %v39, %v58
  %60 = vdwg.mxu0
  %v61 = vtanh.pop %v59
  %v62 = vld [vmem:[%s3] sm:$0xff]
  %v63 = vld [vmem:[%s3 + $0x8] sm:$0xff]
  %v64 = vld [vmem:[%s3 + $0x10] sm:$0xff]
  %v65 = vld [vmem:[%s3 + $0x18] sm:$0xff]
  %v66 = vld [vmem:[%s3 + $0x20] sm:$0xff]
  %v67 = vld [vmem:[%s3 + $0x28] sm:$0xff]
  %v68 = vld [vmem:[%s3 + $0x30] sm:$0xff]
  %v69 = vld [vmem:[%s3 + $0x38] sm:$0xff]
  %v70 = vld [vmem:[%s3 + $0x40] sm:$0xff]
  %v71 = vld [vmem:[%s3 + $0x48] sm:$0xff]
  %v72 = vld [vmem:[%s3 + $0x50] sm:$0xff]
  %v73 = vld [vmem:[%s3 + $0x58] sm:$0xff]
  %v74 = vld [vmem:[%s3 + $0x60] sm:$0xff]
  %v75 = vld [vmem:[%s3 + $0x68] sm:$0xff]
  %v76 = vld [vmem:[%s3 + $0x70] sm:$0xff]
  %v77 = vld [vmem:[%s3 + $0x78] sm:$0xff]
  %v78 = vld [vmem:[%s4] sm:$0x1]
  %v80 = vperm.slane %v78, 0
  %82 = vmatpush.msra.mxu0 %v77
  %83 = vmatpush.msra.mxu0 %v76
  %84 = vmatpush.msra.mxu0 %v75
  %85 = vmatpush.msra.mxu0 %v74
  %86 = vmatpush.msra.mxu0 %v73
  %87 = vmatpush.msra.mxu0 %v72
  %88 = vmatpush.msra.mxu0 %v71
  %89 = vmatpush.msra.mxu0 %v70
  %90 = vmatpush.msra.mxu0 %v69
  %91 = vmatpush.msra.mxu0 %v68
  %92 = vmatpush.msra.mxu0 %v67
  %93 = vmatpush.msra.mxu0 %v66
  %94 = vmatpush.msra.mxu0 %v65
  %95 = vmatpush.msra.mxu0 %v64
  %96 = vmatpush.msra.mxu0 %v63
  %97 = vmatpush.msra.mxu0 %v62
  %98 = vmatmul.f32.gmra.mxu0 %v61
  %v99 = vpop.f32.mrf.mxu0
  %v100 = vadd.f32 %v80, %v99
  %101 = vdwg.mxu0
  %102 = vst [vmem:[%s5] sm:$0xff] %v100
  // Predicated region
  $region22: #{fully_connected_forward.1} parent=0 // pred_check
    _
  $region23: #{fully_connected_forward.1} parent=0 // pred_check_branch
    %104 = sbr.rel (0) target = $region25
  $region24: #{fully_connected_forward.1} parent=0 // pred_region
    _
  $region25: #{fully_connected_forward.1} parent=0 // pred_fallthru
    _
  // Predicated region
  $region26: #{fully_connected_forward.1} parent=0 // pred_check
    _
  $region27: #{fully_connected_forward.1} parent=0 // pred_check_branch
    %106 = sbr.rel (0) target = $region29
  $region28: #{fully_connected_forward.1} parent=0 // pred_region
    _
  $region29: #{fully_connected_forward.1} parent=0 // pred_fallthru
    _

</llo_original>
